<compile_context>
chip_gen: v7x
topology: tpu7x:2x2x1
jax: 0.10.0
libtpu: 0.0.40
codegen_flags: <defaults>
</compile_context>

<pallas_src>
import functools
import math

import jax
import jax.numpy as jnp
from jax.experimental import pallas as pl
from jax.experimental.pallas import tpu as pltpu


def _round_up(n: int, m: int) -> int:
    return ((n + m - 1) // m) * m


def _vmem_capacity_bytes() -> int:
    """Physical VMEM per TensorCore; conservatively assume v7x (64 MiB) if undetectable."""
    try:
        cap = int(getattr(pltpu.get_tpu_info(), "vmem_capacity_bytes"))
        if cap > 0:
            return cap
    except Exception:
        pass
    return 64 * 1024 * 1024


# --------------------------------------------------------------------------------------
# Kernels
# --------------------------------------------------------------------------------------
def _mlp_fused_kernel(*refs, num_layers: int, relu_mask: tuple, compute_dtype):
    """Whole MLP for one batch tile.  refs = (x, w1, b1, ..., wn, bn, out)."""
    x_ref = refs[0]
    o_ref = refs[-1]
    wb = refs[1:-1]

    h = x_ref[...]
    for i in range(num_layers):
        w = wb[2 * i][...]          # (IN_p, OUT_p), pre-transposed, lane-dense
        b = wb[2 * i + 1][...]      # (1, OUT_p), f32, broadcasts over rows
        acc = jnp.dot(h, w, preferred_element_type=jnp.float32) + b
        if relu_mask[i]:
            acc = jnp.maximum(acc, 0.0)
        # Cast carried activation back to the compute dtype so the next matmul stays on the
        # MXU fast path (bf16 when compute_dtype is bf16); accumulation remains f32 per-dot.
        h = acc if i == num_layers - 1 else acc.astype(compute_dtype)
    o_ref[...] = h.astype(o_ref.dtype)


def _linear_kernel(x_ref, w_ref, b_ref, o_ref, acc_ref, *, apply_relu: bool):
    """Fallback per-layer tiled matmul: grid = (M, N, K), K is the reduction axis."""
    k = pl.program_id(2)

    @pl.when(k == 0)
    def _():
        acc_ref[...] = jnp.zeros_like(acc_ref)

    acc_ref[...] += jnp.dot(x_ref[...], w_ref[...], preferred_element_type=jnp.float32)

    @pl.when(k == pl.num_programs(2) - 1)
    def _():
        h = acc_ref[...] + b_ref[...]
        if apply_relu:
            h = jnp.maximum(h, 0.0)
        o_ref[...] = h.astype(o_ref.dtype)


# --------------------------------------------------------------------------------------
# Parameter pre-packing (done once, reused across forward calls)
# --------------------------------------------------------------------------------------
def prepack_mlp_params(params, in_dim: int, compute_dtype=jnp.float32):
    """Transpose torch-layout (out, in) weights to (in_p, out_p), pad to 128-lane-dense shapes,
    and cast to an explicit compute dtype.  Biases are kept in f32."""
    compute_dtype = jnp.dtype(compute_dtype)
    dims = [int(in_dim)] + [int(w.shape[0]) for (w, _) in params]
    dims_p = [_round_up(d, 128) for d in dims]

    weights, biases = [], []
    for idx, (w, b) in enumerate(params):
        out_d, in_d = w.shape
        in_p, out_p = dims_p[idx], dims_p[idx + 1]
        wp = jnp.zeros((in_p, out_p), compute_dtype).at[:in_d, :out_d].set(
            jnp.asarray(w).T.astype(compute_dtype))
        bpad = jnp.zeros((1, out_p), jnp.float32).at[0, :out_d].set(
            jnp.asarray(b).astype(jnp.float32))
        weights.append(wp)
        biases.append(bpad)

    return dict(weights=weights, biases=biases, dims=dims, dims_p=dims_p,
                compute_dtype=compute_dtype)


# --------------------------------------------------------------------------------------
# Forward pass
# --------------------------------------------------------------------------------------
def _choose_tm(batch: int, dims_p, itemsize: int, tile_budget_bytes: int) -> int:
    bp8 = _round_up(max(batch, 1), 8)
    if bp8 <= 8:
        return 8
    # Rough per-row VMEM cost: double-buffered x/out tiles + f32 intermediate activation.
    per_row = 2 * (dims_p[0] + dims_p[-1]) * itemsize + 2 * max(dims_p) * 4
    candidates = [t for t in (512, 256, 128, 64, 32, 16, 8) if t <= bp8] or [8]
    for tm in candidates:
        if tm * per_row > tile_budget_bytes and tm > 8:
            continue
        # Keep >= 2 grid steps when batch >= 16 so both v7x TensorCores get work.
        if batch >= 16 and (_round_up(batch, tm) // tm) < 2 and tm > 8:
            continue
        return tm
    return 8


def _fused_forward(xp, packed, relu_mask, tm, bp, single_buffer_weights, out_dtype):
    dims_p = packed["dims_p"]
    num_layers = len(packed["weights"])
    cdt = packed["compute_dtype"]
    itemsize = cdt.itemsize

    def const_spec(shape):
        # These blocks never change index -> single-buffer them to save VMEM.
        if single_buffer_weights:
            return pl.BlockSpec(shape, lambda i: (0, 0), pipeline_mode=pl.Buffered(1))
        return pl.BlockSpec(shape, lambda i: (0, 0))

    flat_inputs = [xp]
    in_specs = [pl.BlockSpec((tm, dims_p[0]), lambda i: (i, 0))]
    for idx in range(num_layers):
        in_p, out_p = dims_p[idx], dims_p[idx + 1]
        flat_inputs += [packed["weights"][idx], packed["biases"][idx]]
        in_specs += [const_spec((in_p, out_p)), const_spec((1, out_p))]

    out_p = dims_p[-1]
    wbuf = 1 if single_buffer_weights else 2
    weights_bytes = sum(w.nbytes for w in packed["weights"]) * wbuf
    bias_bytes = sum(b.nbytes for b in packed["biases"]) * wbuf
    tile_bytes = 2 * tm * (dims_p[0] + out_p) * itemsize      # double-buffered x / out tiles
    interm_bytes = 2 * tm * max(dims_p) * 4                   # f32 intermediates / spill headroom
    footprint = weights_bytes + bias_bytes + tile_bytes + interm_bytes
    vmem_limit = min(int(0.9 * _vmem_capacity_bytes()),
                     max(footprint + (4 << 20), 32 << 20))

    flops = 2 * bp * sum(dims_p[i] * dims_p[i + 1] for i in range(num_layers))
    bytes_accessed = (xp.nbytes
                      + sum(w.nbytes for w in packed["weights"])
                      + sum(b.nbytes for b in packed["biases"])
                      + bp * out_p * jnp.dtype(out_dtype).itemsize)

    kernel = functools.partial(_mlp_fused_kernel, num_layers=num_layers,
                               relu_mask=tuple(relu_mask), compute_dtype=cdt)

    return pl.pallas_call(
        kernel,
        out_shape=jax.ShapeDtypeStruct((bp, out_p), out_dtype),
        grid_spec=pl.GridSpec(
            grid=(bp // tm,),
            in_specs=in_specs,
            out_specs=pl.BlockSpec((tm, out_p), lambda i: (i, 0)),
        ),
        compiler_params=pltpu.CompilerParams(
            dimension_semantics=("parallel",),
            vmem_limit_bytes=vmem_limit,
        ),
        cost_estimate=pl.CostEstimate(flops=flops, transcendentals=0,
                                      bytes_accessed=bytes_accessed),
    )(*flat_inputs)


def _pick_feature_block(dim_p: int) -> int:
    for c in (512, 384, 256, 128):
        if dim_p % c == 0:
            return min(c, dim_p)
    return dim_p


def _layerwise_forward(x, packed, relu_mask, out_dtype):
    """Fallback for when the resident-weight fused kernel does not fit VMEM (e.g. v7x, big dims)."""
    dims_p = packed["dims_p"]
    cdt = packed["compute_dtype"]
    batch = x.shape[0]
    tm = 256 if batch >= 256 else _round_up(max(batch, 1), 8)
    bp = _round_up(max(batch, 1), tm)

    h = jnp.zeros((bp, dims_p[0]), cdt).at[:batch, : x.shape[1]].set(x.astype(cdt))
    num_layers = len(packed["weights"])
    for idx in range(num_layers):
        in_p, out_p = dims_p[idx], dims_p[idx + 1]
        tk = _pick_feature_block(in_p)
        tn = _pick_feature_block(out_p)
        is_last = idx == num_layers - 1
        layer_out_dtype = out_dtype if is_last else cdt
        vmem_limit = min(int(0.9 * _vmem_capacity_bytes()),
                         max(4 * (tm * tk + tk * tn + 2 * tm * tn) * 4 + (4 << 20), 32 << 20))
        h = pl.pallas_call(
            functools.partial(_linear_kernel, apply_relu=bool(relu_mask[idx])),
            out_shape=jax.ShapeDtypeStruct((bp, out_p), layer_out_dtype),
            grid_spec=pl.GridSpec(
                grid=(bp // tm, out_p // tn, in_p // tk),
                in_specs=[
                    pl.BlockSpec((tm, tk), lambda i, j, k: (i, k)),
                    pl.BlockSpec((tk, tn), lambda i, j, k: (k, j)),
                    pl.BlockSpec((1, tn), lambda i, j, k: (0, j)),
                ],
                out_specs=pl.BlockSpec((tm, tn), lambda i, j, k: (i, j)),
                scratch_shapes=[pltpu.VMEM((tm, tn), jnp.float32)],
            ),
            compiler_params=pltpu.CompilerParams(
                dimension_semantics=("parallel", "parallel", "arbitrary"),
                vmem_limit_bytes=vmem_limit,
            ),
        )(h, packed["weights"][idx], packed["biases"][idx])
    return h[:batch]


def nonlinear_fully_connected_net(x, packed, final_activation: bool = False):
    """Forward pass: Linear_1 -> ReLU -> ... -> Linear_N [-> ReLU if final_activation].

    `packed` comes from prepack_mlp_params (pre-transposed / padded parameters).
    Matches NonLinearFullyConnectedNet(activation=nn.ReLU(), final_activation=None) when
    final_activation=False.
    """
    batch, in_dim = x.shape
    dims, dims_p = packed["dims"], packed["dims_p"]
    assert in_dim == dims[0], f"expected input dim {dims[0]}, got {in_dim}"
    cdt = packed["compute_dtype"]
    num_layers = len(packed["weights"])
    relu_mask = [(i != num_layers - 1) or final_activation for i in range(num_layers)]
    out_dtype = x.dtype
    itemsize = cdt.itemsize

    usable = int(0.8 * _vmem_capacity_bytes())
    weights_bytes = sum(w.nbytes for w in packed["weights"])
    bias_bytes = sum(b.nbytes for b in packed["biases"])
    tile_budget = usable - weights_bytes - bias_bytes - (2 << 20)

    tm = _choose_tm(batch, dims_p, itemsize, tile_budget)
    bp = _round_up(max(batch, 1), tm)

    per_row = 2 * (dims_p[0] + dims_p[-1]) * itemsize + 2 * max(dims_p) * 4
    fused_footprint = weights_bytes + bias_bytes + tm * per_row + (2 << 20)

    if fused_footprint > usable:
        # Resident-weight fused kernel would not fit VMEM: per-layer tiled matmuls instead.
        out_padded = _layerwise_forward(x, packed, relu_mask, out_dtype)
    else:
        # Skip the padding copy when x is already tile- and lane-aligned with the right dtype.
        if bp == batch and dims_p[0] == in_dim and x.dtype == cdt:
            xp = x
        else:
            xp = jnp.zeros((bp, dims_p[0]), cdt).at[:batch, :in_dim].set(x.astype(cdt))
        try:
            out_padded = _fused_forward(xp, packed, relu_mask, tm, bp,
                                        single_buffer_weights=True, out_dtype=out_dtype)
        except Exception:
            # If this jax build rejects Buffered(1), fall back to default double-buffering.
            out_padded = _fused_forward(xp, packed, relu_mask, tm, bp,
                                        single_buffer_weights=False, out_dtype=out_dtype)

    return out_padded[:batch, : dims[-1]]


# --------------------------------------------------------------------------------------
# Init / reference / demo
# --------------------------------------------------------------------------------------
def init_mlp_params(key, layer_dims):
    """Deterministic init mimicking torch.nn.Linear default U(-1/sqrt(fan_in), 1/sqrt(fan_in)).
    Weights are kept in torch layout (out_features, in_features); prepack transposes/pads."""
    params = []
    for i in range(len(layer_dims) - 1):
        in_dim, out_dim = layer_dims[i], layer_dims[i + 1]
        key, kw, kb = jax.random.split(key, 3)
        bound = 1.0 / math.sqrt(in_dim)
        w = jax.random.uniform(kw, (out_dim, in_dim), jnp.float32, -bound, bound)
        b = jax.random.uniform(kb, (out_dim,), jnp.float32, -bound, bound)
        params.append((w, b))
    return params


def _reference_forward(x, params, final_activation: bool = False):
    n = len(params)
    out = x
    for idx, (w, b) in enumerate(params):
        out = out @ w.T + b
        if (idx != n - 1) or final_activation:
            out = jnp.maximum(out, 0.0)
    return out


if __name__ == "__main__":
    key = jax.random.PRNGKey(0)
    layer_dims = [32, 64, 48, 16]   # 3 Linear layers, 2 interior ReLUs, no final activation
    batch = 8

    key, kx, kp = jax.random.split(key, 3)
    x = jax.random.normal(kx, (batch, layer_dims[0]), jnp.float32)
    params = init_mlp_params(kp, layer_dims)

    # Pre-pack parameters once (transpose + pad + cast), reuse across forward calls.
    packed = prepack_mlp_params(params, in_dim=layer_dims[0], compute_dtype=jnp.float32)

    out = nonlinear_fully_connected_net(x, packed)
    out = jax.block_until_ready(out)

    ref = _reference_forward(x, params)
    assert out.shape == (batch, layer_dims[-1])
    assert jnp.allclose(out, ref, atol=1e-4, rtol=1e-4), "Pallas output mismatch vs reference"

    print("KERNEL_OK")
</pallas_src>

<mosaic_0001>
module attributes {stable_mosaic.version = 11 : i64} {
  func.func @_mlp_fused_kernel(%arg0: i32, %arg1: memref<8x128xf32, #tpu.memory_space<vmem>>, %arg2: memref<128x128xf32, #tpu.memory_space<vmem>>, %arg3: memref<1x128xf32, #tpu.memory_space<vmem>>, %arg4: memref<128x128xf32, #tpu.memory_space<vmem>>, %arg5: memref<1x128xf32, #tpu.memory_space<vmem>>, %arg6: memref<128x128xf32, #tpu.memory_space<vmem>>, %arg7: memref<1x128xf32, #tpu.memory_space<vmem>>, %arg8: memref<8x128xf32, #tpu.memory_space<vmem>>) attributes {dimension_semantics = [#tpu.dimension_semantics<parallel>], iteration_bounds = array<i64: 1>, scalar_prefetch = 0 : i64, scratch_operands = 0 : i64, tpu.core_type = #tpu.core_type<tc>, window_params = [{transform_indices = @transform_0, window_bounds = array<i64: 8, 128>}, {pipeline_mode = #tpu.pipeline_mode<synchronous>, transform_indices = @transform_1, window_bounds = array<i64: 128, 128>}, {pipeline_mode = #tpu.pipeline_mode<synchronous>, transform_indices = @transform_2, window_bounds = array<i64: 1, 128>}, {pipeline_mode = #tpu.pipeline_mode<synchronous>, transform_indices = @transform_3, window_bounds = array<i64: 128, 128>}, {pipeline_mode = #tpu.pipeline_mode<synchronous>, transform_indices = @transform_4, window_bounds = array<i64: 1, 128>}, {pipeline_mode = #tpu.pipeline_mode<synchronous>, transform_indices = @transform_5, window_bounds = array<i64: 128, 128>}, {pipeline_mode = #tpu.pipeline_mode<synchronous>, transform_indices = @transform_6, window_bounds = array<i64: 1, 128>}, {transform_indices = @transform_7, window_bounds = array<i64: 8, 128>}]} {
    %c0 = arith.constant 0 : index
    %c0_0 = arith.constant 0 : index
    %0 = vector.load %arg1[%c0, %c0_0] : memref<8x128xf32, #tpu.memory_space<vmem>>, vector<8x128xf32>
    %c0_1 = arith.constant 0 : index
    %c0_2 = arith.constant 0 : index
    %1 = vector.load %arg2[%c0_1, %c0_2] : memref<128x128xf32, #tpu.memory_space<vmem>>, vector<128x128xf32>
    %c0_3 = arith.constant 0 : index
    %c0_4 = arith.constant 0 : index
    %2 = vector.load %arg3[%c0_3, %c0_4] : memref<1x128xf32, #tpu.memory_space<vmem>>, vector<1x128xf32>
    %cst = arith.constant dense<0.000000e+00> : vector<8x128xf32>
    %3 = tpu.matmul %0, %1, %cst {dimension_numbers = #tpu.dot_dimension_numbers<[1], [0], [0], [1], [0, 0, 1, 1], [], []>} : vector<8x128xf32>, vector<128x128xf32>, vector<8x128xf32> -> vector<8x128xf32>
    %4 = vector.broadcast %2 : vector<1x128xf32> to vector<8x128xf32>
    %5 = arith.addf %3, %4 : vector<8x128xf32>
    %cst_5 = arith.constant 0.000000e+00 : f32
    %6 = vector.broadcast %cst_5 : f32 to vector<8x128xf32>
    %7 = arith.maximumf %5, %6 : vector<8x128xf32>
    %c0_6 = arith.constant 0 : index
    %c0_7 = arith.constant 0 : index
    %8 = vector.load %arg4[%c0_6, %c0_7] : memref<128x128xf32, #tpu.memory_space<vmem>>, vector<128x128xf32>
    %c0_8 = arith.constant 0 : index
    %c0_9 = arith.constant 0 : index
    %9 = vector.load %arg5[%c0_8, %c0_9] : memref<1x128xf32, #tpu.memory_space<vmem>>, vector<1x128xf32>
    %cst_10 = arith.constant dense<0.000000e+00> : vector<8x128xf32>
    %10 = tpu.matmul %7, %8, %cst_10 {dimension_numbers = #tpu.dot_dimension_numbers<[1], [0], [0], [1], [0, 0, 1, 1], [], []>} : vector<8x128xf32>, vector<128x128xf32>, vector<8x128xf32> -> vector<8x128xf32>
    %11 = vector.broadcast %9 : vector<1x128xf32> to vector<8x128xf32>
    %12 = arith.addf %10, %11 : vector<8x128xf32>
    %cst_11 = arith.constant 0.000000e+00 : f32
    %13 = vector.broadcast %cst_11 : f32 to vector<8x128xf32>
    %14 = arith.maximumf %12, %13 : vector<8x128xf32>
    %c0_12 = arith.constant 0 : index
    %c0_13 = arith.constant 0 : index
    %15 = vector.load %arg6[%c0_12, %c0_13] : memref<128x128xf32, #tpu.memory_space<vmem>>, vector<128x128xf32>
    %c0_14 = arith.constant 0 : index
    %c0_15 = arith.constant 0 : index
    %16 = vector.load %arg7[%c0_14, %c0_15] : memref<1x128xf32, #tpu.memory_space<vmem>>, vector<1x128xf32>
    %cst_16 = arith.constant dense<0.000000e+00> : vector<8x128xf32>
    %17 = tpu.matmul %14, %15, %cst_16 {dimension_numbers = #tpu.dot_dimension_numbers<[1], [0], [0], [1], [0, 0, 1, 1], [], []>} : vector<8x128xf32>, vector<128x128xf32>, vector<8x128xf32> -> vector<8x128xf32>
    %18 = vector.broadcast %16 : vector<1x128xf32> to vector<8x128xf32>
    %19 = arith.addf %17, %18 : vector<8x128xf32>
    %c0_17 = arith.constant 0 : index
    %c0_18 = arith.constant 0 : index
    %20 = vector.load %arg8[%c0_17, %c0_18] : memref<8x128xf32, #tpu.memory_space<vmem>>, vector<8x128xf32>
    tpu.vector_store %arg8[%c0_17, %c0_18], %19 {strides = array<i32>} : memref<8x128xf32, #tpu.memory_space<vmem>>, vector<8x128xf32>,
    return
  }
  func.func @transform_0(%arg0: i32) -> (i32, i32) {
    %c0_i32 = arith.constant 0 : i32
    %c0_i32_0 = arith.constant 0 : i32
    return %arg0, %c0_i32 : i32, i32
  }
  func.func @transform_1(%arg0: i32) -> (i32, i32) {
    %c0_i32 = arith.constant 0 : i32
    %c0_i32_0 = arith.constant 0 : i32
    %c0_i32_1 = arith.constant 0 : i32
    return %c0_i32, %c0_i32_0 : i32, i32
  }
  func.func @transform_2(%arg0: i32) -> (i32, i32) {
    %c0_i32 = arith.constant 0 : i32
    %c0_i32_0 = arith.constant 0 : i32
    %c0_i32_1 = arith.constant 0 : i32
    return %c0_i32, %c0_i32_0 : i32, i32
  }
  func.func @transform_3(%arg0: i32) -> (i32, i32) {
    %c0_i32 = arith.constant 0 : i32
    %c0_i32_0 = arith.constant 0 : i32
    %c0_i32_1 = arith.constant 0 : i32
    return %c0_i32, %c0_i32_0 : i32, i32
  }
  func.func @transform_4(%arg0: i32) -> (i32, i32) {
    %c0_i32 = arith.constant 0 : i32
    %c0_i32_0 = arith.constant 0 : i32
    %c0_i32_1 = arith.constant 0 : i32
    return %c0_i32, %c0_i32_0 : i32, i32
  }
  func.func @transform_5(%arg0: i32) -> (i32, i32) {
    %c0_i32 = arith.constant 0 : i32
    %c0_i32_0 = arith.constant 0 : i32
    %c0_i32_1 = arith.constant 0 : i32
    return %c0_i32, %c0_i32_0 : i32, i32
  }
  func.func @transform_6(%arg0: i32) -> (i32, i32) {
    %c0_i32 = arith.constant 0 : i32
    %c0_i32_0 = arith.constant 0 : i32
    %c0_i32_1 = arith.constant 0 : i32
    return %c0_i32, %c0_i32_0 : i32, i32
  }
  func.func @transform_7(%arg0: i32) -> (i32, i32) {
    %c0_i32 = arith.constant 0 : i32
    %c0_i32_0 = arith.constant 0 : i32
    return %arg0, %c0_i32 : i32, i32
  }
}

module attributes {stable_mosaic.version = 11 : i64} {
  func.func @_mlp_fused_kernel(%arg0: i32, %arg1: memref<8x128xf32, #tpu.memory_space<vmem>>, %arg2: memref<128x128xf32, #tpu.memory_space<vmem>>, %arg3: memref<1x128xf32, #tpu.memory_space<vmem>>, %arg4: memref<128x128xf32, #tpu.memory_space<vmem>>, %arg5: memref<1x128xf32, #tpu.memory_space<vmem>>, %arg6: memref<128x128xf32, #tpu.memory_space<vmem>>, %arg7: memref<1x128xf32, #tpu.memory_space<vmem>>, %arg8: memref<8x128xf32, #tpu.memory_space<vmem>>) attributes {dimension_semantics = [#tpu.dimension_semantics<parallel>], iteration_bounds = array<i64: 1>, scalar_prefetch = 0 : i64, scratch_operands = 0 : i64, tpu.core_type = #tpu.core_type<tc>, window_params = [{transform_indices = @transform_0, window_bounds = array<i64: 8, 128>}, {pipeline_mode = #tpu.pipeline_mode<synchronous>, transform_indices = @transform_1, window_bounds = array<i64: 128, 128>}, {pipeline_mode = #tpu.pipeline_mode<synchronous>, transform_indices = @transform_2, window_bounds = array<i64: 1, 128>}, {pipeline_mode = #tpu.pipeline_mode<synchronous>, transform_indices = @transform_3, window_bounds = array<i64: 128, 128>}, {pipeline_mode = #tpu.pipeline_mode<synchronous>, transform_indices = @transform_4, window_bounds = array<i64: 1, 128>}, {pipeline_mode = #tpu.pipeline_mode<synchronous>, transform_indices = @transform_5, window_bounds = array<i64: 128, 128>}, {pipeline_mode = #tpu.pipeline_mode<synchronous>, transform_indices = @transform_6, window_bounds = array<i64: 1, 128>}, {transform_indices = @transform_7, window_bounds = array<i64: 8, 128>}]} {
    %c0 = arith.constant 0 : index
    %c0_0 = arith.constant 0 : index
    %0 = vector.load %arg1[%c0, %c0_0] : memref<8x128xf32, #tpu.memory_space<vmem>>, vector<8x128xf32>
    %c0_1 = arith.constant 0 : index
    %c0_2 = arith.constant 0 : index
    %1 = vector.load %arg2[%c0_1, %c0_2] : memref<128x128xf32, #tpu.memory_space<vmem>>, vector<128x128xf32>
    %c0_3 = arith.constant 0 : index
    %c0_4 = arith.constant 0 : index
    %2 = vector.load %arg3[%c0_3, %c0_4] : memref<1x128xf32, #tpu.memory_space<vmem>>, vector<1x128xf32>
    %cst = arith.constant dense<0.000000e+00> : vector<8x128xf32>
    %3 = tpu.matmul %0, %1, %cst {dimension_numbers = #tpu.dot_dimension_numbers<[1], [0], [0], [1], [0, 0, 1, 1], [], []>} : vector<8x128xf32>, vector<128x128xf32>, vector<8x128xf32> -> vector<8x128xf32>
    %4 = vector.broadcast %2 : vector<1x128xf32> to vector<8x128xf32>
    %5 = arith.addf %3, %4 : vector<8x128xf32>
    %cst_5 = arith.constant 0.000000e+00 : f32
    %6 = vector.broadcast %cst_5 : f32 to vector<8x128xf32>
    %7 = arith.maximumf %5, %6 : vector<8x128xf32>
    %c0_6 = arith.constant 0 : index
    %c0_7 = arith.constant 0 : index
    %8 = vector.load %arg4[%c0_6, %c0_7] : memref<128x128xf32, #tpu.memory_space<vmem>>, vector<128x128xf32>
    %c0_8 = arith.constant 0 : index
    %c0_9 = arith.constant 0 : index
    %9 = vector.load %arg5[%c0_8, %c0_9] : memref<1x128xf32, #tpu.memory_space<vmem>>, vector<1x128xf32>
    %cst_10 = arith.constant dense<0.000000e+00> : vector<8x128xf32>
    %10 = tpu.matmul %7, %8, %cst_10 {dimension_numbers = #tpu.dot_dimension_numbers<[1], [0], [0], [1], [0, 0, 1, 1], [], []>} : vector<8x128xf32>, vector<128x128xf32>, vector<8x128xf32> -> vector<8x128xf32>
    %11 = vector.broadcast %9 : vector<1x128xf32> to vector<8x128xf32>
    %12 = arith.addf %10, %11 : vector<8x128xf32>
    %cst_11 = arith.constant 0.000000e+00 : f32
    %13 = vector.broadcast %cst_11 : f32 to vector<8x128xf32>
    %14 = arith.maximumf %12, %13 : vector<8x128xf32>
    %c0_12 = arith.constant 0 : index
    %c0_13 = arith.constant 0 : index
    %15 = vector.load %arg6[%c0_12, %c0_13] : memref<128x128xf32, #tpu.memory_space<vmem>>, vector<128x128xf32>
    %c0_14 = arith.constant 0 : index
    %c0_15 = arith.constant 0 : index
    %16 = vector.load %arg7[%c0_14, %c0_15] : memref<1x128xf32, #tpu.memory_space<vmem>>, vector<1x128xf32>
    %cst_16 = arith.constant dense<0.000000e+00> : vector<8x128xf32>
    %17 = tpu.matmul %14, %15, %cst_16 {dimension_numbers = #tpu.dot_dimension_numbers<[1], [0], [0], [1], [0, 0, 1, 1], [], []>} : vector<8x128xf32>, vector<128x128xf32>, vector<8x128xf32> -> vector<8x128xf32>
    %18 = vector.broadcast %16 : vector<1x128xf32> to vector<8x128xf32>
    %19 = arith.addf %17, %18 : vector<8x128xf32>
    %c0_17 = arith.constant 0 : index
    %c0_18 = arith.constant 0 : index
    %20 = vector.load %arg8[%c0_17, %c0_18] : memref<8x128xf32, #tpu.memory_space<vmem>>, vector<8x128xf32>
    tpu.vector_store %arg8[%c0_17, %c0_18], %19 {strides = array<i32>} : memref<8x128xf32, #tpu.memory_space<vmem>>, vector<8x128xf32>,
    return
  }
  func.func @transform_0(%arg0: i32) -> (i32, i32) {
    %c0_i32 = arith.constant 0 : i32
    %c0_i32_0 = arith.constant 0 : i32
    return %arg0, %c0_i32 : i32, i32
  }
  func.func @transform_1(%arg0: i32) -> (i32, i32) {
    %c0_i32 = arith.constant 0 : i32
    %c0_i32_0 = arith.constant 0 : i32
    %c0_i32_1 = arith.constant 0 : i32
    return %c0_i32, %c0_i32_0 : i32, i32
  }
  func.func @transform_2(%arg0: i32) -> (i32, i32) {
    %c0_i32 = arith.constant 0 : i32
    %c0_i32_0 = arith.constant 0 : i32
    %c0_i32_1 = arith.constant 0 : i32
    return %c0_i32, %c0_i32_0 : i32, i32
  }
  func.func @transform_3(%arg0: i32) -> (i32, i32) {
    %c0_i32 = arith.constant 0 : i32
    %c0_i32_0 = arith.constant 0 : i32
    %c0_i32_1 = arith.constant 0 : i32
    return %c0_i32, %c0_i32_0 : i32, i32
  }
  func.func @transform_4(%arg0: i32) -> (i32, i32) {
    %c0_i32 = arith.constant 0 : i32
    %c0_i32_0 = arith.constant 0 : i32
    %c0_i32_1 = arith.constant 0 : i32
    return %c0_i32, %c0_i32_0 : i32, i32
  }
  func.func @transform_5(%arg0: i32) -> (i32, i32) {
    %c0_i32 = arith.constant 0 : i32
    %c0_i32_0 = arith.constant 0 : i32
    %c0_i32_1 = arith.constant 0 : i32
    return %c0_i32, %c0_i32_0 : i32, i32
  }
  func.func @transform_6(%arg0: i32) -> (i32, i32) {
    %c0_i32 = arith.constant 0 : i32
    %c0_i32_0 = arith.constant 0 : i32
    %c0_i32_1 = arith.constant 0 : i32
    return %c0_i32, %c0_i32_0 : i32, i32
  }
  func.func @transform_7(%arg0: i32) -> (i32, i32) {
    %c0_i32 = arith.constant 0 : i32
    %c0_i32_0 = arith.constant 0 : i32
    return %arg0, %c0_i32 : i32, i32
  }
}

</mosaic_0001>

<llo_original>
// kernel: tpu_custom_call.1
$region0: #{tpu_custom_call.1}
  #allocation0 [shape = 'u32[]', space=smem, size = 0x4, offset = 0x4, fixed_abs, tag = 'smem constant byte address 0x4 - core index']
  #allocation1 [shape = 'u32[144,128]{1,0:T(1,128)}', space=vmem, size = 0x12000, scoped, tag = 'internal scratch']
  %s0 = inlined_call_operand.hbm [shape: f32[8,128], index: 0, kind: input, shape index: {}]
  %s1 = inlined_call_operand.hbm [shape: f32[128,128], index: 1, kind: input, shape index: {}]
  %s2 = inlined_call_operand.vmem [shape: f32[1,128], index: 2, kind: input, shape index: {}]
  %s3 = inlined_call_operand.hbm [shape: f32[128,128], index: 3, kind: input, shape index: {}]
  %s4 = inlined_call_operand.vmem [shape: f32[1,128], index: 4, kind: input, shape index: {}]
  %s5 = inlined_call_operand.hbm [shape: f32[128,128], index: 5, kind: input, shape index: {}]
  %s6 = inlined_call_operand.vmem [shape: f32[1,128], index: 6, kind: input, shape index: {}]
  %s7 = inlined_call_operand.hbm [shape: f32[8,128], index: 7, kind: output, shape index: {}]
  %s8 = sld [smem:[#allocation0]]
  $region54: #{tpu_custom_call.1} parent=0
    _
  %s10 = ssub.s32 1, %s8
  %s11 = scalar_select 0, %s10, %s8
  $region1: #{tpu_custom_call.1} parent=0
    #allocation2 [shape = 'u8[4096]{0}', space=vmem, size = 0x1000, scoped, tag = 'input window, operand 0, single buffered']
    #allocation3 [shape = 's32[1]{0}', space=sflag, size = 0x4, scoped, tag = 'scoped memory for tpu_custom_call.1']
    #allocation4 [shape = 's32[1]{0}', space=sflag, size = 0x4, scoped, tag = 'scoped memory for tpu_custom_call.1']
    #allocation5 [shape = 'u8[65536]{0}', space=vmem, size = 0x10000, scoped, tag = 'input window, operand 1, single buffered']
    #allocation6 [shape = 's32[1]{0}', space=sflag, size = 0x4, scoped, tag = 'scoped memory for tpu_custom_call.1']
    #allocation7 [shape = 'u8[65536]{0}', space=vmem, size = 0x10000, scoped, tag = 'input window, operand 3, single buffered']
    #allocation8 [shape = 'u8[65536]{0}', space=vmem, size = 0x10000, scoped, tag = 'input window, operand 5, single buffered']
    #allocation9 [shape = 's32[1]{0}', space=sflag, size = 0x4, scoped, tag = 'scoped memory for tpu_custom_call.1']
    #allocation10 [shape = 'u8[4096]{0}', space=vmem, size = 0x1000, scoped, tag = 'output window, operand 0, single buffered']
    %12 = vsyncpa [#allocation3], 0
    %13 = vsyncpa [#allocation6], 0
    %14 = vsyncpa [#allocation9], 0
    %15 = vsyncpa [#allocation4], 0
    // Predicated region
    $region2: #{tpu_custom_call.1} parent=1 // pred_check
      _
    $region3: #{tpu_custom_call.1} parent=1 // pred_check_branch
      %17 = sbr.rel (0) target = $region5
    $region4: #{tpu_custom_call.1} parent=1 // pred_region
      %s19 = ssub.s32 128, 128
      %20 = vsyncadd [#allocation3], %s19
      %s22 = sshll.u32 [#allocation2], 4
      %s23 = int_to_ptr.vmem [resolvable:$true] %s22
      %25 = dma.hbm_to_vmem [thread:$0]  %s0, 128, %s23, [#allocation3]
    $region5: #{tpu_custom_call.1} parent=1 // pred_fallthru
      _
    // Predicated region
    $region6: #{tpu_custom_call.1} parent=1 // pred_check
      _
    $region7: #{tpu_custom_call.1} parent=1 // pred_check_branch
      %27 = sbr.rel (0) target = $region9
    $region8: #{tpu_custom_call.1} parent=1 // pred_region
      %s29 = ssub.s32 2048, 2048
      %30 = vsyncadd [#allocation6], %s29
      %s31 = sshll.u32 [#allocation5], 4
      %s32 = int_to_ptr.vmem [resolvable:$true] %s31
      %37 = dma.hbm_to_vmem [thread:$0]  %s1, 2048, %s32, [#allocation6], 128, 128, 8
    $region9: #{tpu_custom_call.1} parent=1 // pred_fallthru
      _
    // Predicated region
    $region10: #{tpu_custom_call.1} parent=1 // pred_check
      _
    $region11: #{tpu_custom_call.1} parent=1 // pred_check_branch
      %39 = sbr.rel (0) target = $region13
    $region12: #{tpu_custom_call.1} parent=1 // pred_region
      _
    $region13: #{tpu_custom_call.1} parent=1 // pred_fallthru
      _
    // Predicated region
    $region14: #{tpu_custom_call.1} parent=1 // pred_check
      _
    $region15: #{tpu_custom_call.1} parent=1 // pred_check_branch
      %41 = sbr.rel (0) target = $region17
    $region16: #{tpu_custom_call.1} parent=1 // pred_region
      %s43 = ssub.s32 2048, 2048
      %44 = vsyncadd [#allocation6], %s43
      %s45 = sshll.u32 [#allocation7], 4
      %s46 = int_to_ptr.vmem [resolvable:$true] %s45
      %51 = dma.hbm_to_vmem [thread:$0]  %s3, 2048, %s46, [#allocation6], 128, 128, 8
    $region17: #{tpu_custom_call.1} parent=1 // pred_fallthru
      _
    // Predicated region
    $region18: #{tpu_custom_call.1} parent=1 // pred_check
      _
    $region19: #{tpu_custom_call.1} parent=1 // pred_check_branch
      %53 = sbr.rel (0) target = $region21
    $region20: #{tpu_custom_call.1} parent=1 // pred_region
      _
    $region21: #{tpu_custom_call.1} parent=1 // pred_fallthru
      _
    // Predicated region
    $region22: #{tpu_custom_call.1} parent=1 // pred_check
      _
    $region23: #{tpu_custom_call.1} parent=1 // pred_check_branch
      %55 = sbr.rel (0) target = $region25
    $region24: #{tpu_custom_call.1} parent=1 // pred_region
      %s57 = ssub.s32 2048, 2048
      %58 = vsyncadd [#allocation9], %s57
      %s59 = sshll.u32 [#allocation8], 4
      %s60 = int_to_ptr.vmem [resolvable:$true] %s59
      %65 = dma.hbm_to_vmem [thread:$0]  %s5, 2048, %s60, [#allocation9], 128, 128, 8
    $region25: #{tpu_custom_call.1} parent=1 // pred_fallthru
      _
    // Predicated region
    $region26: #{tpu_custom_call.1} parent=1 // pred_check
      _
    $region27: #{tpu_custom_call.1} parent=1 // pred_check_branch
      %67 = sbr.rel (0) target = $region29
    $region28: #{tpu_custom_call.1} parent=1 // pred_region
      _
    $region29: #{tpu_custom_call.1} parent=1 // pred_fallthru
      _
    // Predicated region
    $region30: #{tpu_custom_call.1} parent=1 // pred_check
      _
    $region31: #{tpu_custom_call.1} parent=1 // pred_check_branch
      %69 = sbr.rel (0) target = $region33
    $region32: #{tpu_custom_call.1} parent=1 // pred_region
      %70 = dma.done [#allocation3], 128
    $region33: #{tpu_custom_call.1} parent=1 // pred_fallthru
      _
    // Predicated region
    $region34: #{tpu_custom_call.1} parent=1 // pred_check
      _
    $region35: #{tpu_custom_call.1} parent=1 // pred_check_branch
      %72 = sbr.rel (0) target = $region37
    $region36: #{tpu_custom_call.1} parent=1 // pred_region
      %73 = dma.done [#allocation6], 2048
    $region37: #{tpu_custom_call.1} parent=1 // pred_fallthru
      _
    // Predicated region
    $region38: #{tpu_custom_call.1} parent=1 // pred_check
      _
    $region39: #{tpu_custom_call.1} parent=1 // pred_check_branch
      %75 = sbr.rel (0) target = $region41
    $region40: #{tpu_custom_call.1} parent=1 // pred_region
      %76 = dma.done [#allocation6], 2048
    $region41: #{tpu_custom_call.1} parent=1 // pred_fallthru
      _
    // Predicated region
    $region42: #{tpu_custom_call.1} parent=1 // pred_check
      _
    $region43: #{tpu_custom_call.1} parent=1 // pred_check_branch
      %78 = sbr.rel (0) target = $region45
    $region44: #{tpu_custom_call.1} parent=1 // pred_region
      %79 = dma.done [#allocation9], 2048
    $region45: #{tpu_custom_call.1} parent=1 // pred_fallthru
      _
    %v80 = vld [vmem:[#allocation2] sm:$0xff]
    %v81 = vld [vmem:[#allocation5] sm:$0xff]
    %v82 = vld [vmem:[#allocation5 + $0x8] sm:$0xff]
    %v83 = vld [vmem:[#allocation5 + $0x10] sm:$0xff]
    %v84 = vld [vmem:[#allocation5 + $0x18] sm:$0xff]
    %v85 = vld [vmem:[#allocation5 + $0x20] sm:$0xff]
    %v86 = vld [vmem:[#allocation5 + $0x28] sm:$0xff]
    %v87 = vld [vmem:[#allocation5 + $0x30] sm:$0xff]
    %v88 = vld [vmem:[#allocation5 + $0x38] sm:$0xff]
    %v89 = vld [vmem:[#allocation5 + $0x40] sm:$0xff]
    %v90 = vld [vmem:[#allocation5 + $0x48] sm:$0xff]
    %v91 = vld [vmem:[#allocation5 + $0x50] sm:$0xff]
    %v92 = vld [vmem:[#allocation5 + $0x58] sm:$0xff]
    %v93 = vld [vmem:[#allocation5 + $0x60] sm:$0xff]
    %v94 = vld [vmem:[#allocation5 + $0x68] sm:$0xff]
    %v95 = vld [vmem:[#allocation5 + $0x70] sm:$0xff]
    %v96 = vld [vmem:[#allocation5 + $0x78] sm:$0xff]
    %v97 = vld [vmem:[%s2] sm:$0x1]
    %v99 = vlaneseq
    %v100 = vshrl.u32 %v99, 7
    %v101 = vsub.s32 0, %v100
    %v102 = vrot.slane %v97, %v101
    %104 = vmatprep.subr.mxu0 0.0
    %105 = vmatpush1.msra.mxu0 %v81
    %106 = vmatprep.subr.mxu0 0.0
    %107 = vmatpush1.msra.mxu0 %v82
    %108 = vmatprep.subr.mxu0 0.0
    %109 = vmatpush1.msra.mxu0 %v83
    %110 = vmatprep.subr.mxu0 0.0
    %111 = vmatpush1.msra.mxu0 %v84
    %112 = vmatprep.subr.mxu0 0.0
    %113 = vmatpush1.msra.mxu0 %v85
    %114 = vmatprep.subr.mxu0 0.0
    %115 = vmatpush1.msra.mxu0 %v86
    %116 = vmatprep.subr.mxu0 0.0
    %117 = vmatpush1.msra.mxu0 %v87
    %118 = vmatprep.subr.mxu0 0.0
    %119 = vmatpush1.msra.mxu0 %v88
    %120 = vmatprep.subr.mxu0 0.0
    %121 = vmatpush1.msra.mxu0 %v89
    %122 = vmatprep.subr.mxu0 0.0
    %123 = vmatpush1.msra.mxu0 %v90
    %124 = vmatprep.subr.mxu0 0.0
    %125 = vmatpush1.msra.mxu0 %v91
    %126 = vmatprep.subr.mxu0 0.0
    %127 = vmatpush1.msra.mxu0 %v92
    %128 = vmatprep.subr.mxu0 0.0
    %129 = vmatpush1.msra.mxu0 %v93
    %130 = vmatprep.subr.mxu0 0.0
    %131 = vmatpush1.msra.mxu0 %v94
    %132 = vmatprep.subr.mxu0 0.0
    %133 = vmatpush1.msra.mxu0 %v95
    %134 = vmatprep.subr.mxu0 0.0
    %135 = vmatpush1.msra.mxu0 %v96
    %136 = vmatprep.subr.mxu0 0.0
    %137 = vmatpush1.msra.mxu0 0.0
    %138 = vmatprep.subr.mxu0 0.0
    %139 = vmatpush1.msra.mxu0 0.0
    %140 = vmatprep.subr.mxu0 0.0
    %141 = vmatpush1.msra.mxu0 0.0
    %142 = vmatprep.subr.mxu0 0.0
    %143 = vmatpush1.msra.mxu0 0.0
    %144 = vmatprep.subr.mxu0 0.0
    %145 = vmatpush1.msra.mxu0 0.0
    %146 = vmatprep.subr.mxu0 0.0
    %147 = vmatpush1.msra.mxu0 0.0
    %148 = vmatprep.subr.mxu0 0.0
    %149 = vmatpush1.msra.mxu0 0.0
    %150 = vmatprep.subr.mxu0 0.0
    %151 = vmatpush1.msra.mxu0 0.0
    %152 = vmatprep.subr.mxu0 0.0
    %153 = vmatpush1.msra.mxu0 0.0
    %154 = vmatprep.subr.mxu0 0.0
    %155 = vmatpush1.msra.mxu0 0.0
    %156 = vmatprep.subr.mxu0 0.0
    %157 = vmatpush1.msra.mxu0 0.0
    %158 = vmatprep.subr.mxu0 0.0
    %159 = vmatpush1.msra.mxu0 0.0
    %160 = vmatprep.subr.mxu0 0.0
    %161 = vmatpush1.msra.mxu0 0.0
    %162 = vmatprep.subr.mxu0 0.0
    %163 = vmatpush1.msra.mxu0 0.0
    %164 = vmatprep.subr.mxu0 0.0
    %165 = vmatpush1.msra.mxu0 0.0
    %166 = vmatprep.subr.mxu0 0.0
    %167 = vmatpush1.msra.mxu0 0.0
    %168 = vmatprep.mubr.f32.mxu0 0.0
    %169 = vmatmul.mubr.f32.gmra.mrb[0].mxu0 %v80
    %v170 = vpop.f32.mrb[0].mxu0
    %v171 = vadd.f32 %v102, %v170
    %v172 = vpop.f32.mrb[0].mxu0
    %173 = vdwg.mxu0
    %v174 = vmax.f32 %v171, 0.0
    %v175 = vld [vmem:[#allocation7] sm:$0xff]
    %v176 = vld [vmem:[#allocation7 + $0x8] sm:$0xff]
    %v177 = vld [vmem:[#allocation7 + $0x10] sm:$0xff]
    %v178 = vld [vmem:[#allocation7 + $0x18] sm:$0xff]
    %v179 = vld [vmem:[#allocation7 + $0x20] sm:$0xff]
    %v180 = vld [vmem:[#allocation7 + $0x28] sm:$0xff]
    %v181 = vld [vmem:[#allocation7 + $0x30] sm:$0xff]
    %v182 = vld [vmem:[#allocation7 + $0x38] sm:$0xff]
    %v183 = vld [vmem:[#allocation7 + $0x40] sm:$0xff]
    %v184 = vld [vmem:[#allocation7 + $0x48] sm:$0xff]
    %v185 = vld [vmem:[#allocation7 + $0x50] sm:$0xff]
    %v186 = vld [vmem:[#allocation7 + $0x58] sm:$0xff]
    %v187 = vld [vmem:[#allocation7 + $0x60] sm:$0xff]
    %v188 = vld [vmem:[#allocation7 + $0x68] sm:$0xff]
    %v189 = vld [vmem:[#allocation7 + $0x70] sm:$0xff]
    %v190 = vld [vmem:[#allocation7 + $0x78] sm:$0xff]
    %v191 = vld [vmem:[%s4] sm:$0x1]
    %v193 = vlaneseq
    %v194 = vshrl.u32 %v193, 7
    %v195 = vsub.s32 0, %v194
    %v196 = vrot.slane %v191, %v195
    %198 = vmatprep.subr.mxu0 0.0
    %199 = vmatpush1.msra.mxu0 %v175
    %200 = vmatprep.subr.mxu0 0.0
    %201 = vmatpush1.msra.mxu0 %v176
    %202 = vmatprep.subr.mxu0 0.0
    %203 = vmatpush1.msra.mxu0 %v177
    %204 = vmatprep.subr.mxu0 0.0
    %205 = vmatpush1.msra.mxu0 %v178
    %206 = vmatprep.subr.mxu0 0.0
    %207 = vmatpush1.msra.mxu0 %v179
    %208 = vmatprep.subr.mxu0 0.0
    %209 = vmatpush1.msra.mxu0 %v180
    %210 = vmatprep.subr.mxu0 0.0
    %211 = vmatpush1.msra.mxu0 %v181
    %212 = vmatprep.subr.mxu0 0.0
    %213 = vmatpush1.msra.mxu0 %v182
    %214 = vmatprep.subr.mxu0 0.0
    %215 = vmatpush1.msra.mxu0 %v183
    %216 = vmatprep.subr.mxu0 0.0
    %217 = vmatpush1.msra.mxu0 %v184
    %218 = vmatprep.subr.mxu0 0.0
    %219 = vmatpush1.msra.mxu0 %v185
    %220 = vmatprep.subr.mxu0 0.0
    %221 = vmatpush1.msra.mxu0 %v186
    %222 = vmatprep.subr.mxu0 0.0
    %223 = vmatpush1.msra.mxu0 %v187
    %224 = vmatprep.subr.mxu0 0.0
    %225 = vmatpush1.msra.mxu0 %v188
    %226 = vmatprep.subr.mxu0 0.0
    %227 = vmatpush1.msra.mxu0 %v189
    %228 = vmatprep.subr.mxu0 0.0
    %229 = vmatpush1.msra.mxu0 %v190
    %230 = vmatprep.subr.mxu0 0.0
    %231 = vmatpush1.msra.mxu0 0.0
    %232 = vmatprep.subr.mxu0 0.0
    %233 = vmatpush1.msra.mxu0 0.0
    %234 = vmatprep.subr.mxu0 0.0
    %235 = vmatpush1.msra.mxu0 0.0
    %236 = vmatprep.subr.mxu0 0.0
    %237 = vmatpush1.msra.mxu0 0.0
    %238 = vmatprep.subr.mxu0 0.0
    %239 = vmatpush1.msra.mxu0 0.0
    %240 = vmatprep.subr.mxu0 0.0
    %241 = vmatpush1.msra.mxu0 0.0
    %242 = vmatprep.subr.mxu0 0.0
    %243 = vmatpush1.msra.mxu0 0.0
    %244 = vmatprep.subr.mxu0 0.0
    %245 = vmatpush1.msra.mxu0 0.0
    %246 = vmatprep.subr.mxu0 0.0
    %247 = vmatpush1.msra.mxu0 0.0
    %248 = vmatprep.subr.mxu0 0.0
    %249 = vmatpush1.msra.mxu0 0.0
    %250 = vmatprep.subr.mxu0 0.0
    %251 = vmatpush1.msra.mxu0 0.0
    %252 = vmatprep.subr.mxu0 0.0
    %253 = vmatpush1.msra.mxu0 0.0
    %254 = vmatprep.subr.mxu0 0.0
    %255 = vmatpush1.msra.mxu0 0.0
    %256 = vmatprep.subr.mxu0 0.0
    %257 = vmatpush1.msra.mxu0 0.0
    %258 = vmatprep.subr.mxu0 0.0
    %259 = vmatpush1.msra.mxu0 0.0
    %260 = vmatprep.subr.mxu0 0.0
    %261 = vmatpush1.msra.mxu0 0.0
    %262 = vmatprep.mubr.f32.mxu0 0.0
    %263 = vmatmul.mubr.f32.gmra.mrb[0].mxu0 %v174
    %v264 = vpop.f32.mrb[0].mxu0
    %v265 = vadd.f32 %v196, %v264
    %v266 = vpop.f32.mrb[0].mxu0
    %267 = vdwg.mxu0
    %v268 = vmax.f32 %v265, 0.0
    %v269 = vld [vmem:[#allocation8] sm:$0xff]
    %v270 = vld [vmem:[#allocation8 + $0x8] sm:$0xff]
    %v271 = vld [vmem:[#allocation8 + $0x10] sm:$0xff]
    %v272 = vld [vmem:[#allocation8 + $0x18] sm:$0xff]
    %v273 = vld [vmem:[#allocation8 + $0x20] sm:$0xff]
    %v274 = vld [vmem:[#allocation8 + $0x28] sm:$0xff]
    %v275 = vld [vmem:[#allocation8 + $0x30] sm:$0xff]
    %v276 = vld [vmem:[#allocation8 + $0x38] sm:$0xff]
    %v277 = vld [vmem:[#allocation8 + $0x40] sm:$0xff]
    %v278 = vld [vmem:[#allocation8 + $0x48] sm:$0xff]
    %v279 = vld [vmem:[#allocation8 + $0x50] sm:$0xff]
    %v280 = vld [vmem:[#allocation8 + $0x58] sm:$0xff]
    %v281 = vld [vmem:[#allocation8 + $0x60] sm:$0xff]
    %v282 = vld [vmem:[#allocation8 + $0x68] sm:$0xff]
    %v283 = vld [vmem:[#allocation8 + $0x70] sm:$0xff]
    %v284 = vld [vmem:[#allocation8 + $0x78] sm:$0xff]
    %v285 = vld [vmem:[%s6] sm:$0x1]
    %v287 = vlaneseq
    %v288 = vshrl.u32 %v287, 7
    %v289 = vsub.s32 0, %v288
    %v290 = vrot.slane %v285, %v289
    %292 = vmatprep.subr.mxu0 0.0
    %293 = vmatpush1.msra.mxu0 %v269
    %294 = vmatprep.subr.mxu0 0.0
    %295 = vmatpush1.msra.mxu0 %v270
    %296 = vmatprep.subr.mxu0 0.0
    %297 = vmatpush1.msra.mxu0 %v271
    %298 = vmatprep.subr.mxu0 0.0
    %299 = vmatpush1.msra.mxu0 %v272
    %300 = vmatprep.subr.mxu0 0.0
    %301 = vmatpush1.msra.mxu0 %v273
    %302 = vmatprep.subr.mxu0 0.0
    %303 = vmatpush1.msra.mxu0 %v274
    %304 = vmatprep.subr.mxu0 0.0
    %305 = vmatpush1.msra.mxu0 %v275
    %306 = vmatprep.subr.mxu0 0.0
    %307 = vmatpush1.msra.mxu0 %v276
    %308 = vmatprep.subr.mxu0 0.0
    %309 = vmatpush1.msra.mxu0 %v277
    %310 = vmatprep.subr.mxu0 0.0
    %311 = vmatpush1.msra.mxu0 %v278
    %312 = vmatprep.subr.mxu0 0.0
    %313 = vmatpush1.msra.mxu0 %v279
    %314 = vmatprep.subr.mxu0 0.0
    %315 = vmatpush1.msra.mxu0 %v280
    %316 = vmatprep.subr.mxu0 0.0
    %317 = vmatpush1.msra.mxu0 %v281
    %318 = vmatprep.subr.mxu0 0.0
    %319 = vmatpush1.msra.mxu0 %v282
    %320 = vmatprep.subr.mxu0 0.0
    %321 = vmatpush1.msra.mxu0 %v283
    %322 = vmatprep.subr.mxu0 0.0
    %323 = vmatpush1.msra.mxu0 %v284
    %324 = vmatprep.subr.mxu0 0.0
    %325 = vmatpush1.msra.mxu0 0.0
    %326 = vmatprep.subr.mxu0 0.0
    %327 = vmatpush1.msra.mxu0 0.0
    %328 = vmatprep.subr.mxu0 0.0
    %329 = vmatpush1.msra.mxu0 0.0
    %330 = vmatprep.subr.mxu0 0.0
    %331 = vmatpush1.msra.mxu0 0.0
    %332 = vmatprep.subr.mxu0 0.0
    %333 = vmatpush1.msra.mxu0 0.0
    %334 = vmatprep.subr.mxu0 0.0
    %335 = vmatpush1.msra.mxu0 0.0
    %336 = vmatprep.subr.mxu0 0.0
    %337 = vmatpush1.msra.mxu0 0.0
    %338 = vmatprep.subr.mxu0 0.0
    %339 = vmatpush1.msra.mxu0 0.0
    %340 = vmatprep.subr.mxu0 0.0
    %341 = vmatpush1.msra.mxu0 0.0
    %342 = vmatprep.subr.mxu0 0.0
    %343 = vmatpush1.msra.mxu0 0.0
    %344 = vmatprep.subr.mxu0 0.0
    %345 = vmatpush1.msra.mxu0 0.0
    %346 = vmatprep.subr.mxu0 0.0
    %347 = vmatpush1.msra.mxu0 0.0
    %348 = vmatprep.subr.mxu0 0.0
    %349 = vmatpush1.msra.mxu0 0.0
    %350 = vmatprep.subr.mxu0 0.0
    %351 = vmatpush1.msra.mxu0 0.0
    %352 = vmatprep.subr.mxu0 0.0
    %353 = vmatpush1.msra.mxu0 0.0
    %354 = vmatprep.subr.mxu0 0.0
    %355 = vmatpush1.msra.mxu0 0.0
    %356 = vmatprep.mubr.f32.mxu0 0.0
    %357 = vmatmul.mubr.f32.gmra.mrb[0].mxu0 %v268
    %v358 = vpop.f32.mrb[0].mxu0
    %v359 = vadd.f32 %v290, %v358
    %v360 = vpop.f32.mrb[0].mxu0
    %361 = vdwg.mxu0
    %362 = vst [vmem:[#allocation10] sm:$0xff] %v359
    // Predicated region
    $region46: #{tpu_custom_call.1} parent=1 // pred_check
      _
    $region47: #{tpu_custom_call.1} parent=1 // pred_check_branch
      %364 = sbr.rel (0) target = $region49
    $region48: #{tpu_custom_call.1} parent=1 // pred_region
      %s366 = ssub.s32 128, 128
      %367 = vsyncadd [#allocation4], %s366
      %s369 = sshll.u32 [#allocation10], 4
      %s370 = int_to_ptr.vmem [resolvable:$true] %s369
      %372 = dma.vmem_to_hbm [thread:$0]  %s370, 128, %s7, [#allocation4]
    $region49: #{tpu_custom_call.1} parent=1 // pred_fallthru
      _
    // Predicated region
    $region50: #{tpu_custom_call.1} parent=1 // pred_check
      _
    $region51: #{tpu_custom_call.1} parent=1 // pred_check_branch
      %374 = sbr.rel (0) target = $region53
    $region52: #{tpu_custom_call.1} parent=1 // pred_region
      %375 = dma.done [#allocation4], 128
    $region53: #{tpu_custom_call.1} parent=1 // pred_fallthru
      _
    %376 = vsyncpa [#allocation3], 1
    %377 = vsyncpa [#allocation6], 1
    %378 = vsyncpa [#allocation9], 1
    %379 = vsyncpa [#allocation4], 1

// kernel: tpu_custom_call.1
$region0: #{tpu_custom_call.1}
  #allocation0 [shape = 'u32[]', space=smem, size = 0x4, offset = 0x4, fixed_abs, tag = 'smem constant byte address 0x4 - core index']
  #allocation1 [shape = 'u32[144,128]{1,0:T(1,128)}', space=vmem, size = 0x12000, scoped, tag = 'internal scratch']
  %s0 = inlined_call_operand.hbm [shape: f32[8,128], index: 0, kind: input, shape index: {}]
  %s1 = inlined_call_operand.hbm [shape: f32[128,128], index: 1, kind: input, shape index: {}]
  %s2 = inlined_call_operand.vmem [shape: f32[1,128], index: 2, kind: input, shape index: {}]
  %s3 = inlined_call_operand.hbm [shape: f32[128,128], index: 3, kind: input, shape index: {}]
  %s4 = inlined_call_operand.vmem [shape: f32[1,128], index: 4, kind: input, shape index: {}]
  %s5 = inlined_call_operand.hbm [shape: f32[128,128], index: 5, kind: input, shape index: {}]
  %s6 = inlined_call_operand.vmem [shape: f32[1,128], index: 6, kind: input, shape index: {}]
  %s7 = inlined_call_operand.hbm [shape: f32[8,128], index: 7, kind: output, shape index: {}]
  %s8 = sld [smem:[#allocation0]]
  $region54: #{tpu_custom_call.1} parent=0
    _
  %s10 = ssub.s32 1, %s8
  %s11 = scalar_select 0, %s10, %s8
  $region1: #{tpu_custom_call.1} parent=0
    #allocation2 [shape = 'u8[4096]{0}', space=vmem, size = 0x1000, scoped, tag = 'input window, operand 0, single buffered']
    #allocation3 [shape = 's32[1]{0}', space=sflag, size = 0x4, scoped, tag = 'scoped memory for tpu_custom_call.1']
    #allocation4 [shape = 's32[1]{0}', space=sflag, size = 0x4, scoped, tag = 'scoped memory for tpu_custom_call.1']
    #allocation5 [shape = 'u8[65536]{0}', space=vmem, size = 0x10000, scoped, tag = 'input window, operand 1, single buffered']
    #allocation6 [shape = 's32[1]{0}', space=sflag, size = 0x4, scoped, tag = 'scoped memory for tpu_custom_call.1']
    #allocation7 [shape = 'u8[65536]{0}', space=vmem, size = 0x10000, scoped, tag = 'input window, operand 3, single buffered']
    #allocation8 [shape = 'u8[65536]{0}', space=vmem, size = 0x10000, scoped, tag = 'input window, operand 5, single buffered']
    #allocation9 [shape = 's32[1]{0}', space=sflag, size = 0x4, scoped, tag = 'scoped memory for tpu_custom_call.1']
    #allocation10 [shape = 'u8[4096]{0}', space=vmem, size = 0x1000, scoped, tag = 'output window, operand 0, single buffered']
    %12 = vsyncpa [#allocation3], 0
    %13 = vsyncpa [#allocation6], 0
    %14 = vsyncpa [#allocation9], 0
    %15 = vsyncpa [#allocation4], 0
    // Predicated region
    $region2: #{tpu_custom_call.1} parent=1 // pred_check
      _
    $region3: #{tpu_custom_call.1} parent=1 // pred_check_branch
      %17 = sbr.rel (0) target = $region5
    $region4: #{tpu_custom_call.1} parent=1 // pred_region
      %s19 = ssub.s32 128, 128
      %20 = vsyncadd [#allocation3], %s19
      %s22 = sshll.u32 [#allocation2], 4
      %s23 = int_to_ptr.vmem [resolvable:$true] %s22
      %25 = dma.hbm_to_vmem [thread:$0]  %s0, 128, %s23, [#allocation3]
    $region5: #{tpu_custom_call.1} parent=1 // pred_fallthru
      _
    // Predicated region
    $region6: #{tpu_custom_call.1} parent=1 // pred_check
      _
    $region7: #{tpu_custom_call.1} parent=1 // pred_check_branch
      %27 = sbr.rel (0) target = $region9
    $region8: #{tpu_custom_call.1} parent=1 // pred_region
      %s29 = ssub.s32 2048, 2048
      %30 = vsyncadd [#allocation6], %s29
      %s31 = sshll.u32 [#allocation5], 4
      %s32 = int_to_ptr.vmem [resolvable:$true] %s31
      %37 = dma.hbm_to_vmem [thread:$0]  %s1, 2048, %s32, [#allocation6], 128, 128, 8
    $region9: #{tpu_custom_call.1} parent=1 // pred_fallthru
      _
    // Predicated region
    $region10: #{tpu_custom_call.1} parent=1 // pred_check
      _
    $region11: #{tpu_custom_call.1} parent=1 // pred_check_branch
      %39 = sbr.rel (0) target = $region13
    $region12: #{tpu_custom_call.1} parent=1 // pred_region
      _
    $region13: #{tpu_custom_call.1} parent=1 // pred_fallthru
      _
    // Predicated region
    $region14: #{tpu_custom_call.1} parent=1 // pred_check
      _
    $region15: #{tpu_custom_call.1} parent=1 // pred_check_branch
      %41 = sbr.rel (0) target = $region17
    $region16: #{tpu_custom_call.1} parent=1 // pred_region
      %s43 = ssub.s32 2048, 2048
      %44 = vsyncadd [#allocation6], %s43
      %s45 = sshll.u32 [#allocation7], 4
      %s46 = int_to_ptr.vmem [resolvable:$true] %s45
      %51 = dma.hbm_to_vmem [thread:$0]  %s3, 2048, %s46, [#allocation6], 128, 128, 8
    $region17: #{tpu_custom_call.1} parent=1 // pred_fallthru
      _
    // Predicated region
    $region18: #{tpu_custom_call.1} parent=1 // pred_check
      _
    $region19: #{tpu_custom_call.1} parent=1 // pred_check_branch
      %53 = sbr.rel (0) target = $region21
    $region20: #{tpu_custom_call.1} parent=1 // pred_region
      _
    $region21: #{tpu_custom_call.1} parent=1 // pred_fallthru
      _
    // Predicated region
    $region22: #{tpu_custom_call.1} parent=1 // pred_check
      _
    $region23: #{tpu_custom_call.1} parent=1 // pred_check_branch
      %55 = sbr.rel (0) target = $region25
    $region24: #{tpu_custom_call.1} parent=1 // pred_region
      %s57 = ssub.s32 2048, 2048
      %58 = vsyncadd [#allocation9], %s57
      %s59 = sshll.u32 [#allocation8], 4
      %s60 = int_to_ptr.vmem [resolvable:$true] %s59
      %65 = dma.hbm_to_vmem [thread:$0]  %s5, 2048, %s60, [#allocation9], 128, 128, 8
    $region25: #{tpu_custom_call.1} parent=1 // pred_fallthru
      _
    // Predicated region
    $region26: #{tpu_custom_call.1} parent=1 // pred_check
      _
    $region27: #{tpu_custom_call.1} parent=1 // pred_check_branch
      %67 = sbr.rel (0) target = $region29
    $region28: #{tpu_custom_call.1} parent=1 // pred_region
      _
    $region29: #{tpu_custom_call.1} parent=1 // pred_fallthru
      _
    // Predicated region
    $region30: #{tpu_custom_call.1} parent=1 // pred_check
      _
    $region31: #{tpu_custom_call.1} parent=1 // pred_check_branch
      %69 = sbr.rel (0) target = $region33
    $region32: #{tpu_custom_call.1} parent=1 // pred_region
      %70 = dma.done [#allocation3], 128
    $region33: #{tpu_custom_call.1} parent=1 // pred_fallthru
      _
    // Predicated region
    $region34: #{tpu_custom_call.1} parent=1 // pred_check
      _
    $region35: #{tpu_custom_call.1} parent=1 // pred_check_branch
      %72 = sbr.rel (0) target = $region37
    $region36: #{tpu_custom_call.1} parent=1 // pred_region
      %73 = dma.done [#allocation6], 2048
    $region37: #{tpu_custom_call.1} parent=1 // pred_fallthru
      _
    // Predicated region
    $region38: #{tpu_custom_call.1} parent=1 // pred_check
      _
    $region39: #{tpu_custom_call.1} parent=1 // pred_check_branch
      %75 = sbr.rel (0) target = $region41
    $region40: #{tpu_custom_call.1} parent=1 // pred_region
      %76 = dma.done [#allocation6], 2048
    $region41: #{tpu_custom_call.1} parent=1 // pred_fallthru
      _
    // Predicated region
    $region42: #{tpu_custom_call.1} parent=1 // pred_check
      _
    $region43: #{tpu_custom_call.1} parent=1 // pred_check_branch
      %78 = sbr.rel (0) target = $region45
    $region44: #{tpu_custom_call.1} parent=1 // pred_region
      %79 = dma.done [#allocation9], 2048
    $region45: #{tpu_custom_call.1} parent=1 // pred_fallthru
      _
    %v80 = vld [vmem:[#allocation2] sm:$0xff]
    %v81 = vld [vmem:[#allocation5] sm:$0xff]
    %v82 = vld [vmem:[#allocation5 + $0x8] sm:$0xff]
    %v83 = vld [vmem:[#allocation5 + $0x10] sm:$0xff]
    %v84 = vld [vmem:[#allocation5 + $0x18] sm:$0xff]
    %v85 = vld [vmem:[#allocation5 + $0x20] sm:$0xff]
    %v86 = vld [vmem:[#allocation5 + $0x28] sm:$0xff]
    %v87 = vld [vmem:[#allocation5 + $0x30] sm:$0xff]
    %v88 = vld [vmem:[#allocation5 + $0x38] sm:$0xff]
    %v89 = vld [vmem:[#allocation5 + $0x40] sm:$0xff]
    %v90 = vld [vmem:[#allocation5 + $0x48] sm:$0xff]
    %v91 = vld [vmem:[#allocation5 + $0x50] sm:$0xff]
    %v92 = vld [vmem:[#allocation5 + $0x58] sm:$0xff]
    %v93 = vld [vmem:[#allocation5 + $0x60] sm:$0xff]
    %v94 = vld [vmem:[#allocation5 + $0x68] sm:$0xff]
    %v95 = vld [vmem:[#allocation5 + $0x70] sm:$0xff]
    %v96 = vld [vmem:[#allocation5 + $0x78] sm:$0xff]
    %v97 = vld [vmem:[%s2] sm:$0x1]
    %v99 = vlaneseq
    %v100 = vshrl.u32 %v99, 7
    %v101 = vsub.s32 0, %v100
    %v102 = vrot.slane %v97, %v101
    %104 = vmatprep.subr.mxu0 0.0
    %105 = vmatpush1.msra.mxu0 %v81
    %106 = vmatprep.subr.mxu0 0.0
    %107 = vmatpush1.msra.mxu0 %v82
    %108 = vmatprep.subr.mxu0 0.0
    %109 = vmatpush1.msra.mxu0 %v83
    %110 = vmatprep.subr.mxu0 0.0
    %111 = vmatpush1.msra.mxu0 %v84
    %112 = vmatprep.subr.mxu0 0.0
    %113 = vmatpush1.msra.mxu0 %v85
    %114 = vmatprep.subr.mxu0 0.0
    %115 = vmatpush1.msra.mxu0 %v86
    %116 = vmatprep.subr.mxu0 0.0
    %117 = vmatpush1.msra.mxu0 %v87
    %118 = vmatprep.subr.mxu0 0.0
    %119 = vmatpush1.msra.mxu0 %v88
    %120 = vmatprep.subr.mxu0 0.0
    %121 = vmatpush1.msra.mxu0 %v89
    %122 = vmatprep.subr.mxu0 0.0
    %123 = vmatpush1.msra.mxu0 %v90
    %124 = vmatprep.subr.mxu0 0.0
    %125 = vmatpush1.msra.mxu0 %v91
    %126 = vmatprep.subr.mxu0 0.0
    %127 = vmatpush1.msra.mxu0 %v92
    %128 = vmatprep.subr.mxu0 0.0
    %129 = vmatpush1.msra.mxu0 %v93
    %130 = vmatprep.subr.mxu0 0.0
    %131 = vmatpush1.msra.mxu0 %v94
    %132 = vmatprep.subr.mxu0 0.0
    %133 = vmatpush1.msra.mxu0 %v95
    %134 = vmatprep.subr.mxu0 0.0
    %135 = vmatpush1.msra.mxu0 %v96
    %136 = vmatprep.subr.mxu0 0.0
    %137 = vmatpush1.msra.mxu0 0.0
    %138 = vmatprep.subr.mxu0 0.0
    %139 = vmatpush1.msra.mxu0 0.0
    %140 = vmatprep.subr.mxu0 0.0
    %141 = vmatpush1.msra.mxu0 0.0
    %142 = vmatprep.subr.mxu0 0.0
    %143 = vmatpush1.msra.mxu0 0.0
    %144 = vmatprep.subr.mxu0 0.0
    %145 = vmatpush1.msra.mxu0 0.0
    %146 = vmatprep.subr.mxu0 0.0
    %147 = vmatpush1.msra.mxu0 0.0
    %148 = vmatprep.subr.mxu0 0.0
    %149 = vmatpush1.msra.mxu0 0.0
    %150 = vmatprep.subr.mxu0 0.0
    %151 = vmatpush1.msra.mxu0 0.0
    %152 = vmatprep.subr.mxu0 0.0
    %153 = vmatpush1.msra.mxu0 0.0
    %154 = vmatprep.subr.mxu0 0.0
    %155 = vmatpush1.msra.mxu0 0.0
    %156 = vmatprep.subr.mxu0 0.0
    %157 = vmatpush1.msra.mxu0 0.0
    %158 = vmatprep.subr.mxu0 0.0
    %159 = vmatpush1.msra.mxu0 0.0
    %160 = vmatprep.subr.mxu0 0.0
    %161 = vmatpush1.msra.mxu0 0.0
    %162 = vmatprep.subr.mxu0 0.0
    %163 = vmatpush1.msra.mxu0 0.0
    %164 = vmatprep.subr.mxu0 0.0
    %165 = vmatpush1.msra.mxu0 0.0
    %166 = vmatprep.subr.mxu0 0.0
    %167 = vmatpush1.msra.mxu0 0.0
    %168 = vmatprep.mubr.f32.mxu0 0.0
    %169 = vmatmul.mubr.f32.gmra.mrb[0].mxu0 %v80
    %v170 = vpop.f32.mrb[0].mxu0
    %v171 = vadd.f32 %v102, %v170
    %v172 = vpop.f32.mrb[0].mxu0
    %173 = vdwg.mxu0
    %v174 = vmax.f32 %v171, 0.0
    %v175 = vld [vmem:[#allocation7] sm:$0xff]
    %v176 = vld [vmem:[#allocation7 + $0x8] sm:$0xff]
    %v177 = vld [vmem:[#allocation7 + $0x10] sm:$0xff]
    %v178 = vld [vmem:[#allocation7 + $0x18] sm:$0xff]
    %v179 = vld [vmem:[#allocation7 + $0x20] sm:$0xff]
    %v180 = vld [vmem:[#allocation7 + $0x28] sm:$0xff]
    %v181 = vld [vmem:[#allocation7 + $0x30] sm:$0xff]
    %v182 = vld [vmem:[#allocation7 + $0x38] sm:$0xff]
    %v183 = vld [vmem:[#allocation7 + $0x40] sm:$0xff]
    %v184 = vld [vmem:[#allocation7 + $0x48] sm:$0xff]
    %v185 = vld [vmem:[#allocation7 + $0x50] sm:$0xff]
    %v186 = vld [vmem:[#allocation7 + $0x58] sm:$0xff]
    %v187 = vld [vmem:[#allocation7 + $0x60] sm:$0xff]
    %v188 = vld [vmem:[#allocation7 + $0x68] sm:$0xff]
    %v189 = vld [vmem:[#allocation7 + $0x70] sm:$0xff]
    %v190 = vld [vmem:[#allocation7 + $0x78] sm:$0xff]
    %v191 = vld [vmem:[%s4] sm:$0x1]
    %v193 = vlaneseq
    %v194 = vshrl.u32 %v193, 7
    %v195 = vsub.s32 0, %v194
    %v196 = vrot.slane %v191, %v195
    %198 = vmatprep.subr.mxu0 0.0
    %199 = vmatpush1.msra.mxu0 %v175
    %200 = vmatprep.subr.mxu0 0.0
    %201 = vmatpush1.msra.mxu0 %v176
    %202 = vmatprep.subr.mxu0 0.0
    %203 = vmatpush1.msra.mxu0 %v177
    %204 = vmatprep.subr.mxu0 0.0
    %205 = vmatpush1.msra.mxu0 %v178
    %206 = vmatprep.subr.mxu0 0.0
    %207 = vmatpush1.msra.mxu0 %v179
    %208 = vmatprep.subr.mxu0 0.0
    %209 = vmatpush1.msra.mxu0 %v180
    %210 = vmatprep.subr.mxu0 0.0
    %211 = vmatpush1.msra.mxu0 %v181
    %212 = vmatprep.subr.mxu0 0.0
    %213 = vmatpush1.msra.mxu0 %v182
    %214 = vmatprep.subr.mxu0 0.0
    %215 = vmatpush1.msra.mxu0 %v183
    %216 = vmatprep.subr.mxu0 0.0
    %217 = vmatpush1.msra.mxu0 %v184
    %218 = vmatprep.subr.mxu0 0.0
    %219 = vmatpush1.msra.mxu0 %v185
    %220 = vmatprep.subr.mxu0 0.0
    %221 = vmatpush1.msra.mxu0 %v186
    %222 = vmatprep.subr.mxu0 0.0
    %223 = vmatpush1.msra.mxu0 %v187
    %224 = vmatprep.subr.mxu0 0.0
    %225 = vmatpush1.msra.mxu0 %v188
    %226 = vmatprep.subr.mxu0 0.0
    %227 = vmatpush1.msra.mxu0 %v189
    %228 = vmatprep.subr.mxu0 0.0
    %229 = vmatpush1.msra.mxu0 %v190
    %230 = vmatprep.subr.mxu0 0.0
    %231 = vmatpush1.msra.mxu0 0.0
    %232 = vmatprep.subr.mxu0 0.0
    %233 = vmatpush1.msra.mxu0 0.0
    %234 = vmatprep.subr.mxu0 0.0
    %235 = vmatpush1.msra.mxu0 0.0
    %236 = vmatprep.subr.mxu0 0.0
    %237 = vmatpush1.msra.mxu0 0.0
    %238 = vmatprep.subr.mxu0 0.0
    %239 = vmatpush1.msra.mxu0 0.0
    %240 = vmatprep.subr.mxu0 0.0
    %241 = vmatpush1.msra.mxu0 0.0
    %242 = vmatprep.subr.mxu0 0.0
    %243 = vmatpush1.msra.mxu0 0.0
    %244 = vmatprep.subr.mxu0 0.0
    %245 = vmatpush1.msra.mxu0 0.0
    %246 = vmatprep.subr.mxu0 0.0
    %247 = vmatpush1.msra.mxu0 0.0
    %248 = vmatprep.subr.mxu0 0.0
    %249 = vmatpush1.msra.mxu0 0.0
    %250 = vmatprep.subr.mxu0 0.0
    %251 = vmatpush1.msra.mxu0 0.0
    %252 = vmatprep.subr.mxu0 0.0
    %253 = vmatpush1.msra.mxu0 0.0
    %254 = vmatprep.subr.mxu0 0.0
    %255 = vmatpush1.msra.mxu0 0.0
    %256 = vmatprep.subr.mxu0 0.0
    %257 = vmatpush1.msra.mxu0 0.0
    %258 = vmatprep.subr.mxu0 0.0
    %259 = vmatpush1.msra.mxu0 0.0
    %260 = vmatprep.subr.mxu0 0.0
    %261 = vmatpush1.msra.mxu0 0.0
    %262 = vmatprep.mubr.f32.mxu0 0.0
    %263 = vmatmul.mubr.f32.gmra.mrb[0].mxu0 %v174
    %v264 = vpop.f32.mrb[0].mxu0
    %v265 = vadd.f32 %v196, %v264
    %v266 = vpop.f32.mrb[0].mxu0
    %267 = vdwg.mxu0
    %v268 = vmax.f32 %v265, 0.0
    %v269 = vld [vmem:[#allocation8] sm:$0xff]
    %v270 = vld [vmem:[#allocation8 + $0x8] sm:$0xff]
    %v271 = vld [vmem:[#allocation8 + $0x10] sm:$0xff]
    %v272 = vld [vmem:[#allocation8 + $0x18] sm:$0xff]
    %v273 = vld [vmem:[#allocation8 + $0x20] sm:$0xff]
    %v274 = vld [vmem:[#allocation8 + $0x28] sm:$0xff]
    %v275 = vld [vmem:[#allocation8 + $0x30] sm:$0xff]
    %v276 = vld [vmem:[#allocation8 + $0x38] sm:$0xff]
    %v277 = vld [vmem:[#allocation8 + $0x40] sm:$0xff]
    %v278 = vld [vmem:[#allocation8 + $0x48] sm:$0xff]
    %v279 = vld [vmem:[#allocation8 + $0x50] sm:$0xff]
    %v280 = vld [vmem:[#allocation8 + $0x58] sm:$0xff]
    %v281 = vld [vmem:[#allocation8 + $0x60] sm:$0xff]
    %v282 = vld [vmem:[#allocation8 + $0x68] sm:$0xff]
    %v283 = vld [vmem:[#allocation8 + $0x70] sm:$0xff]
    %v284 = vld [vmem:[#allocation8 + $0x78] sm:$0xff]
    %v285 = vld [vmem:[%s6] sm:$0x1]
    %v287 = vlaneseq
    %v288 = vshrl.u32 %v287, 7
    %v289 = vsub.s32 0, %v288
    %v290 = vrot.slane %v285, %v289
    %292 = vmatprep.subr.mxu0 0.0
    %293 = vmatpush1.msra.mxu0 %v269
    %294 = vmatprep.subr.mxu0 0.0
    %295 = vmatpush1.msra.mxu0 %v270
    %296 = vmatprep.subr.mxu0 0.0
    %297 = vmatpush1.msra.mxu0 %v271
    %298 = vmatprep.subr.mxu0 0.0
    %299 = vmatpush1.msra.mxu0 %v272
    %300 = vmatprep.subr.mxu0 0.0
    %301 = vmatpush1.msra.mxu0 %v273
    %302 = vmatprep.subr.mxu0 0.0
    %303 = vmatpush1.msra.mxu0 %v274
    %304 = vmatprep.subr.mxu0 0.0
    %305 = vmatpush1.msra.mxu0 %v275
    %306 = vmatprep.subr.mxu0 0.0
    %307 = vmatpush1.msra.mxu0 %v276
    %308 = vmatprep.subr.mxu0 0.0
    %309 = vmatpush1.msra.mxu0 %v277
    %310 = vmatprep.subr.mxu0 0.0
    %311 = vmatpush1.msra.mxu0 %v278
    %312 = vmatprep.subr.mxu0 0.0
    %313 = vmatpush1.msra.mxu0 %v279
    %314 = vmatprep.subr.mxu0 0.0
    %315 = vmatpush1.msra.mxu0 %v280
    %316 = vmatprep.subr.mxu0 0.0
    %317 = vmatpush1.msra.mxu0 %v281
    %318 = vmatprep.subr.mxu0 0.0
    %319 = vmatpush1.msra.mxu0 %v282
    %320 = vmatprep.subr.mxu0 0.0
    %321 = vmatpush1.msra.mxu0 %v283
    %322 = vmatprep.subr.mxu0 0.0
    %323 = vmatpush1.msra.mxu0 %v284
    %324 = vmatprep.subr.mxu0 0.0
    %325 = vmatpush1.msra.mxu0 0.0
    %326 = vmatprep.subr.mxu0 0.0
    %327 = vmatpush1.msra.mxu0 0.0
    %328 = vmatprep.subr.mxu0 0.0
    %329 = vmatpush1.msra.mxu0 0.0
    %330 = vmatprep.subr.mxu0 0.0
    %331 = vmatpush1.msra.mxu0 0.0
    %332 = vmatprep.subr.mxu0 0.0
    %333 = vmatpush1.msra.mxu0 0.0
    %334 = vmatprep.subr.mxu0 0.0
    %335 = vmatpush1.msra.mxu0 0.0
    %336 = vmatprep.subr.mxu0 0.0
    %337 = vmatpush1.msra.mxu0 0.0
    %338 = vmatprep.subr.mxu0 0.0
    %339 = vmatpush1.msra.mxu0 0.0
    %340 = vmatprep.subr.mxu0 0.0
    %341 = vmatpush1.msra.mxu0 0.0
    %342 = vmatprep.subr.mxu0 0.0
    %343 = vmatpush1.msra.mxu0 0.0
    %344 = vmatprep.subr.mxu0 0.0
    %345 = vmatpush1.msra.mxu0 0.0
    %346 = vmatprep.subr.mxu0 0.0
    %347 = vmatpush1.msra.mxu0 0.0
    %348 = vmatprep.subr.mxu0 0.0
    %349 = vmatpush1.msra.mxu0 0.0
    %350 = vmatprep.subr.mxu0 0.0
    %351 = vmatpush1.msra.mxu0 0.0
    %352 = vmatprep.subr.mxu0 0.0
    %353 = vmatpush1.msra.mxu0 0.0
    %354 = vmatprep.subr.mxu0 0.0
    %355 = vmatpush1.msra.mxu0 0.0
    %356 = vmatprep.mubr.f32.mxu0 0.0
    %357 = vmatmul.mubr.f32.gmra.mrb[0].mxu0 %v268
    %v358 = vpop.f32.mrb[0].mxu0
    %v359 = vadd.f32 %v290, %v358
    %v360 = vpop.f32.mrb[0].mxu0
    %361 = vdwg.mxu0
    %362 = vst [vmem:[#allocation10] sm:$0xff] %v359
    // Predicated region
    $region46: #{tpu_custom_call.1} parent=1 // pred_check
      _
    $region47: #{tpu_custom_call.1} parent=1 // pred_check_branch
      %364 = sbr.rel (0) target = $region49
    $region48: #{tpu_custom_call.1} parent=1 // pred_region
      %s366 = ssub.s32 128, 128
      %367 = vsyncadd [#allocation4], %s366
      %s369 = sshll.u32 [#allocation10], 4
      %s370 = int_to_ptr.vmem [resolvable:$true] %s369
      %372 = dma.vmem_to_hbm [thread:$0]  %s370, 128, %s7, [#allocation4]
    $region49: #{tpu_custom_call.1} parent=1 // pred_fallthru
      _
    // Predicated region
    $region50: #{tpu_custom_call.1} parent=1 // pred_check
      _
    $region51: #{tpu_custom_call.1} parent=1 // pred_check_branch
      %374 = sbr.rel (0) target = $region53
    $region52: #{tpu_custom_call.1} parent=1 // pred_region
      %375 = dma.done [#allocation4], 128
    $region53: #{tpu_custom_call.1} parent=1 // pred_fallthru
      _
    %376 = vsyncpa [#allocation3], 1
    %377 = vsyncpa [#allocation6], 1
    %378 = vsyncpa [#allocation9], 1
    %379 = vsyncpa [#allocation4], 1

</llo_original>
